<compile_context>
chip_gen: v6e
topology: v6e:2x2x1
jax: 0.10.0
libtpu: 0.0.40
codegen_flags: <defaults>
</compile_context>

<pallas_src>
import functools

import jax
import jax.numpy as jnp
from jax.experimental import pallas as pl
from jax.experimental.pallas import tpu as pltpu


def _label_smoothing_kernel(x_ref, t_ref, o_ref, *, confidence, smoothing,
                            n_rows, tile_rows):
    x = x_ref[...].astype(jnp.float32)              # (TN, C)
    tgt = t_ref[...]                                # (TN, 1) int32
    tn, num_classes = x.shape

    # Numerically stable log-softmax pieces, without materializing logprobs:
    #   logprobs = shifted - lse, shifted = x - max(x), lse = log(sum(exp(.)))
    m = jnp.max(x, axis=-1, keepdims=True)                               # (TN,1)
    shifted = x - m                                                      # (TN,C)
    lse = jnp.log(jnp.sum(jnp.exp(shifted), axis=-1, keepdims=True))     # (TN,1)

    # Fused weighted reduction replacing {gather(target), row mean}:
    #   loss = lse - sum_c shifted_c * (smoothing/C + confidence*[c==target])
    col = jax.lax.broadcasted_iota(jnp.int32, shifted.shape, 1)
    base_w = smoothing / num_classes
    scale = jnp.where(col == tgt, base_w + confidence, base_w)           # (TN,C)
    weighted = jnp.sum(shifted * scale, axis=-1, keepdims=True)          # (TN,1)
    loss = lse - weighted                                                # (TN,1)

    # Mask rows past the true N (ragged last tile reads unspecified data; any
    # NaN/Inf it produces is discarded by this select).
    row0 = pl.program_id(0) * tile_rows
    row = row0 + jax.lax.broadcasted_iota(jnp.int32, (tn, 1), 0)
    loss = jnp.where(row < n_rows, loss, 0.0)

    # Per-tile partial sum, written lane-dense into an aligned (1,8,128) block;
    # the host reads element [i, 0, 0] of each tile.
    partial = jnp.sum(loss)
    o_ref[...] = jnp.full(o_ref.shape, partial, dtype=o_ref.dtype)
    # TODO(synk): for bf16 inputs on v6e/v7x (VALU-bound regime) the smoothing
    # row-sum could be offloaded to the idle MXU via dot(x_bf16, ones) instead
    # of the fused VALU reduction above.


def _vmem_capacity_bytes():
    """Physical VMEM of the current TPU generation, with a safe fallback."""
    try:
        info = pltpu.get_tpu_info()
        cap = getattr(info, "vmem_capacity_bytes", None)
        if cap:
            return int(cap)
    except Exception:
        pass
    return 64 * 1024 * 1024  # conservative: v7x physical VMEM


def _choose_tile_rows(n, c, itemsize, pack, vmem_limit_bytes):
    """Largest pack-aligned row tile whose live VMEM footprint fits the budget.

    Budget per row: double-buffered input block (2*C*itemsize) plus ~4 f32
    (TN, C) temporaries materialized by the kernel body, plus target bytes.
    """
    budget = (vmem_limit_bytes * 7) // 8            # headroom for out blocks etc.
    per_row = 2 * c * itemsize + 4 * c * 4 + 2 * 4 + 16
    tile_rows = (budget // per_row) // pack * pack
    tile_rows = max(pack, min(1024, tile_rows))
    # TODO(synk): if even a `pack`-row tile overflows the budget (huge C), add a
    # second grid axis over C with an online logsumexp.
    n_pad = -(-n // pack) * pack
    # Cap at ceil(N/2) (pack-rounded) so n_tiles >= 2 -> both v7x TCs get work.
    half = -(-((n + 1) // 2) // pack) * pack
    tile_rows = min(tile_rows, max(pack, half), n_pad)
    return tile_rows


def label_smoothing_loss(x, target, *, smoothing=0.1, tile_rows=None,
                         vmem_limit_bytes=None):
    """x: (N, C) float logits (bf16 preferred for bandwidth; math is f32),
    target: (N,) int class indices in [0, C).  Returns the scalar loss sum."""
    N, C = x.shape
    confidence = 1.0 - smoothing
    itemsize = jnp.dtype(x.dtype).itemsize
    pack = max(8, 32 // itemsize)                   # sublane packing: f32=8, bf16=16

    if vmem_limit_bytes is None:
        cap = _vmem_capacity_bytes()
        vmem_limit_bytes = min((cap * 3) // 4, 100 * 1024 * 1024)

    if tile_rows is None:
        tile_rows = _choose_tile_rows(N, C, itemsize, pack, vmem_limit_bytes)
    assert tile_rows % pack == 0 and tile_rows > 0

    n_tiles = -(-N // tile_rows)
    t2d = target.astype(jnp.int32).reshape(N, 1)

    kernel = functools.partial(
        _label_smoothing_kernel, confidence=confidence, smoothing=smoothing,
        n_rows=N, tile_rows=tile_rows)

    partials = pl.pallas_call(
        kernel,
        out_shape=jax.ShapeDtypeStruct((n_tiles, 8, 128), jnp.float32),
        grid_spec=pltpu.PrefetchScalarGridSpec(
            num_scalar_prefetch=0,
            grid=(n_tiles,),
            in_specs=[
                pl.BlockSpec((tile_rows, C), lambda i: (i, 0)),
                pl.BlockSpec((tile_rows, 1), lambda i: (i, 0)),
            ],
            out_specs=pl.BlockSpec((1, 8, 128), lambda i: (i, 0, 0)),
        ),
        compiler_params=pltpu.CompilerParams(
            dimension_semantics=("parallel",),
            vmem_limit_bytes=vmem_limit_bytes,
        ),
    )(x, t2d)

    # One tiny host-side reduction over n_tiles partial sums.
    return jnp.sum(partials[:, 0, 0])


def _reference(x, target, smoothing=0.1):
    confidence = 1.0 - smoothing
    logprobs = jax.nn.log_softmax(x.astype(jnp.float32), axis=-1)
    nll = -jnp.take_along_axis(logprobs, target[:, None], axis=-1)[:, 0]
    smooth = -jnp.mean(logprobs, axis=-1)
    return jnp.sum(confidence * nll + smoothing * smooth)


if __name__ == "__main__":
    key = jax.random.PRNGKey(0)
    kx, kt, kx2, kt2, kx3, kt3 = jax.random.split(key, 6)

    # Case 1: small, N divisible by the tile (2 tiles -> exercises parallel grid).
    N, C = 16, 32
    x = jax.random.normal(kx, (N, C), dtype=jnp.float32)
    target = jax.random.randint(kt, (N,), 0, C, dtype=jnp.int32)
    loss = jax.block_until_ready(label_smoothing_loss(x, target))
    ref = _reference(x, target)
    assert jnp.allclose(loss, ref, rtol=1e-5, atol=1e-5), (loss, ref)

    # Case 2: ragged N (exercises the in-kernel row-mask path, no jnp.pad).
    N2, C2 = 13, 40
    x2 = jax.random.normal(kx2, (N2, C2), dtype=jnp.float32)
    target2 = jax.random.randint(kt2, (N2,), 0, C2, dtype=jnp.int32)
    loss2 = jax.block_until_ready(label_smoothing_loss(x2, target2))
    ref2 = _reference(x2, target2)
    assert jnp.allclose(loss2, ref2, rtol=1e-5, atol=1e-5), (loss2, ref2)

    # Case 3: bf16 logits, lane-aligned C, ragged N (16-row packing path).
    N3, C3 = 40, 256
    x3 = jax.random.normal(kx3, (N3, C3), dtype=jnp.float32).astype(jnp.bfloat16)
    target3 = jax.random.randint(kt3, (N3,), 0, C3, dtype=jnp.int32)
    loss3 = jax.block_until_ready(label_smoothing_loss(x3, target3))
    ref3 = _reference(x3, target3)  # reference also upcasts the bf16 values
    assert jnp.allclose(loss3, ref3, rtol=1e-4, atol=1e-4), (loss3, ref3)

    print("KERNEL_OK")
</pallas_src>

<mosaic_0001>
module attributes {stable_mosaic.version = 11 : i64} {
  func.func @_label_smoothing_kernel(%arg0: i32, %arg1: memref<8x32xf32, #tpu.memory_space<vmem>>, %arg2: memref<8x1xi32, #tpu.memory_space<vmem>>, %arg3: memref<1x8x128xf32, #tpu.memory_space<vmem>>) attributes {dimension_semantics = [#tpu.dimension_semantics<parallel>], iteration_bounds = array<i64: 2>, scalar_prefetch = 0 : i64, scratch_operands = 0 : i64, tpu.core_type = #tpu.core_type<tc>, window_params = [{transform_indices = @transform_0, window_bounds = array<i64: 8, 32>}, {transform_indices = @transform_1, window_bounds = array<i64: 8, 1>}, {transform_indices = @transform_2, window_bounds = array<i64: 1, 8, 128>}]} {
    %c0 = arith.constant 0 : index
    %c0_0 = arith.constant 0 : index
    %0 = vector.load %arg1[%c0, %c0_0] : memref<8x32xf32, #tpu.memory_space<vmem>>, vector<8x32xf32>
    %c0_1 = arith.constant 0 : index
    %c0_2 = arith.constant 0 : index
    %1 = vector.load %arg2[%c0_1, %c0_2] : memref<8x1xi32, #tpu.memory_space<vmem>>, vector<8x1xi32>
    %cst = arith.constant dense<0xFF800000> : vector<8xf32>
    %2 = vector.multi_reduction <maximumf>, %0, %cst [1] : vector<8x32xf32> to vector<8xf32>
    %3 = vector.shape_cast %2 : vector<8xf32> to vector<8x1xf32>
    %4 = vector.broadcast %3 : vector<8x1xf32> to vector<8x32xf32>
    %5 = arith.subf %0, %4 : vector<8x32xf32>
    %6 = math.exp %5 : vector<8x32xf32>
    %cst_3 = arith.constant dense<0.000000e+00> : vector<8xf32>
    %7 = vector.multi_reduction <add>, %6, %cst_3 [1] : vector<8x32xf32> to vector<8xf32>
    %8 = vector.shape_cast %7 : vector<8xf32> to vector<8x1xf32>
    %9 = math.log %8 : vector<8x1xf32>
    %10 = tpu.iota {dimensions = array<i32: 1>} : vector<8x32xi32>
    %11 = vector.broadcast %1 : vector<8x1xi32> to vector<8x32xi32>
    %12 = arith.cmpi eq, %10, %11 : vector<8x32xi32>
    %cst_4 = arith.constant 0.903124988 : f32
    %cst_5 = arith.constant 3.125000e-03 : f32
    %13 = vector.broadcast %cst_4 : f32 to vector<8x32xf32>
    %14 = vector.broadcast %cst_5 : f32 to vector<8x32xf32>
    %15 = arith.select %12, %13, %14 : vector<8x32xi1>, vector<8x32xf32>
    %16 = arith.mulf %5, %15 : vector<8x32xf32>
    %cst_6 = arith.constant dense<0.000000e+00> : vector<8xf32>
    %17 = vector.multi_reduction <add>, %16, %cst_6 [1] : vector<8x32xf32> to vector<8xf32>
    %18 = vector.shape_cast %17 : vector<8xf32> to vector<8x1xf32>
    %19 = arith.subf %9, %18 : vector<8x1xf32>
    %c8_i32 = arith.constant 8 : i32
    %20 = arith.muli %arg0, %c8_i32 : i32
    %21 = tpu.iota {dimensions = array<i32: 0>} : vector<8x1xi32>
    %22 = vector.broadcast %20 : i32 to vector<8x1xi32>
    %23 = arith.addi %22, %21 : vector<8x1xi32>
    %c16_i32 = arith.constant 16 : i32
    %24 = vector.broadcast %c16_i32 : i32 to vector<8x1xi32>
    %25 = arith.cmpi slt, %23, %24 : vector<8x1xi32>
    %cst_7 = arith.constant 0.000000e+00 : f32
    %26 = vector.broadcast %cst_7 : f32 to vector<8x1xf32>
    %27 = arith.select %25, %19, %26 : vector<8x1xi1>, vector<8x1xf32>
    %28 = vector.shape_cast %27 : vector<8x1xf32> to vector<1x8x1xf32>
    %cst_8 = arith.constant dense<0.000000e+00> : vector<1xf32>
    %29 = vector.multi_reduction <add>, %28, %cst_8 [1, 2] : vector<1x8x1xf32> to vector<1xf32>
    %30 = vector.shape_cast %29 : vector<1xf32> to vector<1x1x1xf32>
    %31 = vector.extract %30[0, 0, 0] : f32 from vector<1x1x1xf32>
    %32 = vector.broadcast %31 : f32 to vector<1x8x128xf32>
    %c0_9 = arith.constant 0 : index
    %c0_10 = arith.constant 0 : index
    %c0_11 = arith.constant 0 : index
    %33 = vector.load %arg3[%c0_9, %c0_10, %c0_11] : memref<1x8x128xf32, #tpu.memory_space<vmem>>, vector<1x8x128xf32>
    tpu.vector_store %arg3[%c0_9, %c0_10, %c0_11], %32 {strides = array<i32>} : memref<1x8x128xf32, #tpu.memory_space<vmem>>, vector<1x8x128xf32>,
    return
  }
  func.func @transform_0(%arg0: i32) -> (i32, i32) {
    %c0_i32 = arith.constant 0 : i32
    %c0_i32_0 = arith.constant 0 : i32
    return %arg0, %c0_i32 : i32, i32
  }
  func.func @transform_1(%arg0: i32) -> (i32, i32) {
    %c0_i32 = arith.constant 0 : i32
    %c0_i32_0 = arith.constant 0 : i32
    return %arg0, %c0_i32 : i32, i32
  }
  func.func @transform_2(%arg0: i32) -> (i32, i32, i32) {
    %c0_i32 = arith.constant 0 : i32
    %c0_i32_0 = arith.constant 0 : i32
    %c0_i32_1 = arith.constant 0 : i32
    return %arg0, %c0_i32, %c0_i32_0 : i32, i32, i32
  }
}

</mosaic_0001>

<llo_original>
// kernel: tpu_custom_call.1
$region0: #{tpu_custom_call.1}
  #allocation0 [shape = 'u32[]', space=smem, size = 0x4, offset = 0x4, fixed_abs, tag = 'smem constant byte address 0x4 - core index']
  #allocation1 [shape = 'u32[144,128]{1,0:T(1,128)}', space=vmem, size = 0x12000, scoped, tag = 'internal scratch']
  %s0 = inlined_call_operand.vmem [shape: f32[16,32], index: 0, kind: input, shape index: {}]
  %s1 = inlined_call_operand.vmem [shape: s32[16,1], index: 1, kind: input, shape index: {}]
  %s2 = inlined_call_operand.hbm [shape: f32[2,8,128], index: 2, kind: output, shape index: {}]
  %s3 = sld [smem:[#allocation0]]
  $region41: #{tpu_custom_call.1} parent=0
    _
  %s5 = ssub.s32 1, %s3
  %s6 = scalar_select 0, %s5, %s3
  $region1: #{tpu_custom_call.1} parent=0
    #allocation2 [shape = 'u8[8192]{0}', space=vmem, size = 0x2000, scoped, tag = 'output window, operand 0']
    #allocation3 [shape = 's32[2]{0}', space=sflag, size = 0x8, scoped, tag = 'scoped memory for tpu_custom_call.1']
    %7 = vsyncpa [#allocation3], 0
    %s8 = scalar_lea.sflag [#allocation3], 1
    %9 = vsyncpa %s8, 0
    loop: start=0, step=1, limit=4
    $region2: #{tpu_custom_call.1} parent=1 // loop_pre_header
      _
    $region3: #{tpu_custom_call.1} parent=1 // loop_header
      %s11 = sphi 0, %s15
      %p12 = scmp.ge.s32.totalorder %s11, 4
      %s21 = sphi 0, %s23
      %s24 = sphi 0, %s21
      %s25 = sphi 0, %s24
      %s41 = sphi 0, %s25
      %s47 = sphi 0, %s49
      %s50 = sphi 0, %s47
      %s51 = sphi 0, %s50
      %s67 = sphi 0, %s51
      %s73 = sphi 0, %s75
      %s76 = sphi 0, %s73
      %s77 = sphi 0, %s76
      %s93 = sphi 0, %s77
    $region4: #{tpu_custom_call.1} parent=1 // loop_header_branch
      %14 = sbr.rel (%p12) target = $region8
    $region5: #{tpu_custom_call.1} parent=1 // loop_body
      %s16 = ssub.s32 %s11, 1
      %s17 = ssub.s32 %s11, 2
      %s18 = sadd.s32 %s11, 1
      %s19 = ssub.s32 %s11, %s18
      %p20 = scmp.eq.s32.totalorder %s19, 0
      %s22 = sadd.s32 %s21, 1
      %s23 = scalar_select %p20, %s21, %s22
      %p26 = pneg %p20
      %p27 = scmp.eq.s32.totalorder %s11, 1
      %p28 = por %p26, %p27
      %p29 = scmp.ne.s32.totalorder %s21, %s24
      %p30 = scmp.eq.s32.totalorder %s11, 0
      %p31 = por %p29, %p30
      %p32 = scmp.ne.s32.totalorder %s21, %s24
      %p33 = scmp.eq.s32.totalorder %s16, 1
      %p34 = por %p32, %p33
      %p35 = scmp.ne.s32.totalorder %s24, %s25
      %p36 = scmp.eq.s32.totalorder %s16, 0
      %p37 = por %p35, %p36
      %p38 = scmp.ne.s32.totalorder %s24, %s25
      %p39 = scmp.eq.s32.totalorder %s17, 1
      %p40 = por %p38, %p39
      %p42 = scmp.ne.s32.totalorder %s25, %s41
      %p43 = scmp.eq.s32.totalorder %s17, 0
      %p44 = por %p42, %p43
      %s45 = ssub.s32 %s11, %s18
      %p46 = scmp.eq.s32.totalorder %s45, 0
      %s48 = sadd.s32 %s47, 1
      %s49 = scalar_select %p46, %s47, %s48
      %p52 = pneg %p46
      %p53 = scmp.eq.s32.totalorder %s11, 1
      %p54 = por %p52, %p53
      %p55 = scmp.ne.s32.totalorder %s47, %s50
      %p56 = scmp.eq.s32.totalorder %s11, 0
      %p57 = por %p55, %p56
      %p58 = scmp.ne.s32.totalorder %s47, %s50
      %p59 = scmp.eq.s32.totalorder %s16, 1
      %p60 = por %p58, %p59
      %p61 = scmp.ne.s32.totalorder %s50, %s51
      %p62 = scmp.eq.s32.totalorder %s16, 0
      %p63 = por %p61, %p62
      %p64 = scmp.ne.s32.totalorder %s50, %s51
      %p65 = scmp.eq.s32.totalorder %s17, 1
      %p66 = por %p64, %p65
      %p68 = scmp.ne.s32.totalorder %s51, %s67
      %p69 = scmp.eq.s32.totalorder %s17, 0
      %p70 = por %p68, %p69
      %s71 = ssub.s32 %s11, %s18
      %p72 = scmp.eq.s32.totalorder %s71, 0
      %s74 = sadd.s32 %s73, 1
      %s75 = scalar_select %p72, %s73, %s74
      %p78 = pneg %p72
      %p79 = scmp.eq.s32.totalorder %s11, 1
      %p80 = por %p78, %p79
      %p81 = scmp.ne.s32.totalorder %s73, %s76
      %p82 = scmp.eq.s32.totalorder %s11, 0
      %p83 = por %p81, %p82
      %p84 = scmp.ne.s32.totalorder %s73, %s76
      %p85 = scmp.eq.s32.totalorder %s16, 1
      %p86 = por %p84, %p85
      %p87 = scmp.ne.s32.totalorder %s76, %s77
      %p88 = scmp.eq.s32.totalorder %s16, 0
      %p89 = por %p87, %p88
      %p90 = scmp.ne.s32.totalorder %s76, %s77
      %p91 = scmp.eq.s32.totalorder %s17, 1
      %p92 = por %p90, %p91
      %p94 = scmp.ne.s32.totalorder %s77, %s93
      %p95 = scmp.eq.s32.totalorder %s17, 0
      %p96 = por %p94, %p95
      %p97 = scmp.le.s32.totalorder 1, %s11
      %p98 = scmp.lt.s32.totalorder %s11, 3
      %p99 = pnand %p97, %p98
      %p100 = pneg %p99
      // Predicated region
      $region9: #{tpu_custom_call.1} parent=5 // pred_check
        _
      $region10: #{tpu_custom_call.1} parent=5 // pred_check_branch
        %102 = sbr.rel (%p99) target = $region12
      $region11: #{tpu_custom_call.1} parent=5 // pred_region
        %s103 = ssub.s32 %s11, 1
      $region12: #{tpu_custom_call.1} parent=5 // pred_fallthru
        _
      %p104 = scmp.lt.s32.totalorder %s11, 2
      // Predicated region
      $region13: #{tpu_custom_call.1} parent=5 // pred_check
        %p105 = pneg %p104
      $region14: #{tpu_custom_call.1} parent=5 // pred_check_branch
        %107 = sbr.rel (%p105) target = $region16
      $region15: #{tpu_custom_call.1} parent=5 // pred_region
        // Predicated region
        $region17: #{tpu_custom_call.1} parent=15 // pred_check
          %p108 = pneg %p31
        $region18: #{tpu_custom_call.1} parent=15 // pred_check_branch
          %110 = sbr.rel (%p108) target = $region20
        $region19: #{tpu_custom_call.1} parent=15 // pred_region
          %p111 = scmp.lt.s32.totalorder %s11, 1
          %s112 = scalar_select %p111, %s11, 1
          %s113 = smul.addr %s112, 8
          %s114 = scalar_lea.vmem %s0, %s113
        $region20: #{tpu_custom_call.1} parent=15 // pred_fallthru
          _
        // Predicated region
        $region21: #{tpu_custom_call.1} parent=15 // pred_check
          %p115 = pneg %p57
        $region22: #{tpu_custom_call.1} parent=15 // pred_check_branch
          %117 = sbr.rel (%p115) target = $region24
        $region23: #{tpu_custom_call.1} parent=15 // pred_region
          %p118 = scmp.lt.s32.totalorder %s11, 1
          %s119 = scalar_select %p118, %s11, 1
          %s120 = smul.addr %s119, 8
          %s121 = scalar_lea.vmem %s1, %s120
        $region24: #{tpu_custom_call.1} parent=15 // pred_fallthru
          _
      $region16: #{tpu_custom_call.1} parent=5 // pred_fallthru
        _
      %p122 = scmp.le.s32.totalorder 1, %s11
      %p123 = scmp.lt.s32.totalorder %s11, 3
      %p124 = pnand %p122, %p123
      %p125 = pneg %p124
      // Predicated region
      $region25: #{tpu_custom_call.1} parent=5 // pred_check
        _
      $region26: #{tpu_custom_call.1} parent=5 // pred_check_branch
        %127 = sbr.rel (%p124) target = $region28
      $region27: #{tpu_custom_call.1} parent=5 // pred_region
        %s128 = ssub.s32 %s11, 1
        %p129 = scmp.lt.s32.totalorder %s16, 1
        %s130 = scalar_select %p129, %s16, 1
        %s131 = smul.addr %s130, 8
        %s132 = scalar_lea.vmem %s0, %s131
        %p133 = pneg %p37
        %p134 = pneg %p34
        %p135 = scmp.lt.s32.totalorder %s16, 1
        %s136 = scalar_select %p135, %s16, 1
        %s137 = smul.addr %s136, 8
        %s138 = scalar_lea.vmem %s1, %s137
        %p139 = pneg %p63
        %p140 = pneg %p60
        %p141 = pneg %p89
        %p142 = pneg %p86
        %s143 = sand.u32 %s76, 1
        %s144 = scalar_lea.sflag [#allocation3], %s143
        %s145 = sand.u32 %s76, 1
        %s146 = smul.addr %s145, 8
        %s147 = scalar_lea.vmem [#allocation2], %s146
        %p148 = scmp.lt.s32.totalorder %s16, 1
        %s149 = scalar_select %p148, %s16, 1
        %s150 = smul.addr %s149, 8
        %s151 = scalar_lea.vmem %s0, %s150
        %p152 = scmp.lt.s32.totalorder %s16, 1
        %s153 = scalar_select %p152, %s16, 1
        %s154 = smul.addr %s153, 8
        %s155 = scalar_lea.vmem %s1, %s154
        %v156 = vld [vmem:[%s151] sm:$0xff]
        %v157 = vld [vmem:[%s155] sm:$0xff]
        %vm158 = vcmask 261120
        %v159 = vsel %vm158, %v156, -inf
        %160 = vmax.xlane.f32.xlu0 %v159
        %v161 = vpop.xlane.xlu0 %160
        %v162 = vsub.f32 %v156, %v161
        %v163 = vmul.f32 %v162, 1.442695
        %v164 = vpow.pop %v163
        %v165 = vsel %vm158, %v164, 0.0
        %166 = vadd.xlane.f32.xlu0 %v165
        %v167 = vpop.xlane.xlu0 %166
        %v168 = vlog2.pop %v167
        %v169 = vmul.f32 %v168, 0.6931472
        %v170 = vlaneseq
        %v171 = vand.u32 %v170, 127
        %172 = vset.pattern.permute.xlu0 0
        %173 = vperm.xlu0 %172, %v157
        %v174 = vpop.permute.xlu0 %173
        %vm175 = vcmp.eq.s32.totalorder %v171, %v174
        %v176 = vsel %vm175, 0.903125, 0.003125
        %v177 = vmul.f32 %v162, %v176
        %v178 = vsel %vm158, %v177, 0.0
        %179 = vadd.xlane.f32.xlu0 %v178
        %v180 = vpop.xlane.xlu0 %179
        %v181 = vsub.f32 %v169, %v180
        %s182 = smul.u32 %s16, 8
        %v183 = vlaneseq
        %v184 = vshrl.u32 %v183, 7
        %v185 = vstv %s182
        %v186 = vadd.s32 %v185, %v184
        %vm187 = vcmp.lt.s32.totalorder %v186, 16
        %v188 = vsel %vm187, %v181, 0.0
        %vm189 = vcmask 7168
        %v190 = vsel %vm189, %v188, 0.0
        %191 = vadd.xlane.f32.xlu0 %v190
        %v192 = vpop.xlane.xlu0 %191
        %v193 = vrot.slane %v192, 4
        %v194 = vadd.f32 %v192, %v193
        %v195 = vrot.slane %v194, 2
        %v196 = vadd.f32 %v194, %v195
        %v197 = vrot.slane %v196, 1
        %v198 = vadd.f32 %v196, %v197
        %s199 = vtos %v198
        %v200 = vstv %s199
        %201 = vst [vmem:[%s147] sm:$0xff] %v200
        %s202 = sand.u32 %s76, 1
        %s203 = scalar_lea.sflag [#allocation3], %s202
        %s204 = sand.u32 %s76, 1
        %s205 = smul.addr %s204, 8
        %s206 = scalar_lea.vmem [#allocation2], %s205
        // Predicated region
        $region29: #{tpu_custom_call.1} parent=27 // pred_check
          %p207 = pneg %p86
        $region30: #{tpu_custom_call.1} parent=27 // pred_check_branch
          %209 = sbr.rel (%p207) target = $region32
        $region31: #{tpu_custom_call.1} parent=27 // pred_region
          %s211 = ssub.s32 128, 128
          %212 = vsyncadd %s203, %s211
          %s213 = smul.addr %s16, 128
          %s214 = scalar_lea.hbm %s2, %s213
          %s216 = sshll.u32 %s206, 4
          %s217 = int_to_ptr.vmem [resolvable:$true] %s216
          %219 = dma.vmem_to_hbm [thread:$0]  %s217, 128, %s214, %s203
        $region32: #{tpu_custom_call.1} parent=27 // pred_fallthru
          _
      $region28: #{tpu_custom_call.1} parent=5 // pred_fallthru
        _
      %p220 = scmp.le.s32.totalorder 2, %s11
      // Predicated region
      $region33: #{tpu_custom_call.1} parent=5 // pred_check
        %p221 = pneg %p220
      $region34: #{tpu_custom_call.1} parent=5 // pred_check_branch
        %223 = sbr.rel (%p221) target = $region36
      $region35: #{tpu_custom_call.1} parent=5 // pred_region
        %s224 = ssub.s32 %s11, 2
        // Predicated region
        $region37: #{tpu_custom_call.1} parent=35 // pred_check
          %p225 = pneg %p92
        $region38: #{tpu_custom_call.1} parent=35 // pred_check_branch
          %227 = sbr.rel (%p225) target = $region40
        $region39: #{tpu_custom_call.1} parent=35 // pred_region
          %s228 = sand.u32 %s77, 1
          %s229 = scalar_lea.sflag [#allocation3], %s228
          %s230 = sand.u32 %s77, 1
          %s231 = smul.addr %s230, 8
          %s232 = scalar_lea.vmem [#allocation2], %s231
          %233 = dma.done %s229, 128
        $region40: #{tpu_custom_call.1} parent=35 // pred_fallthru
          _
      $region36: #{tpu_custom_call.1} parent=5 // pred_fallthru
        _
    $region6: #{tpu_custom_call.1} parent=1 // loop_footer
      %s15 = sadd.s32 1, %s11
    $region7: #{tpu_custom_call.1} parent=1 // loop_footer_branch
      %10 = sbr.rel target = $region3
    $region8: #{tpu_custom_call.1} parent=1 // loop_exit
      _
    %234 = vsyncpa [#allocation3], 1
    %s235 = scalar_lea.sflag [#allocation3], 1
    %236 = vsyncpa %s235, 1

</llo_original>
